<compile_context>
chip_gen: v5e
topology: v5e:2x2
jax: 0.10.0
libtpu: 0.0.40
codegen_flags: <defaults>
</compile_context>

<pallas_src>
from functools import partial

import jax
import jax.numpy as jnp
from jax.experimental import pallas as pl
from jax.experimental.pallas import tpu as pltpu

BATCH = 8            # per-node batch size
INPUT_SIZE = 16      # input_size
HIDDEN = 32          # hidden_size (4*HIDDEN = 128 -> lane-aligned gate block)

H = HIDDEN
GATES = 4 * H                    # 128: gate block width (i|f|g|o)
PH0 = GATES                      # z column where pre-ReLU processed_h starts
PC0 = GATES + H                  # z column where pre-ReLU processed_c starts
ZCOLS = 2 * GATES                # 256: [gate partial | proc slab (128 wide)]
EXT_BIAS_ROW = 2 * H + INPUT_SIZE  # 80: bias (constant 1.0) lane of the ext slab


def _lattice_scan_kernel(ext_ref, init_ref, w1s_ref, w1e_ref, w2_ref,
                         out_ref, state_ref):
    """One lattice step on a [rows, 128] block of stacked (node, batch) rows.

    state slab lanes : [junk | c | junk | h]              (4 blocks of H)
    ext   slab lanes : [h_prev | c_prev | x | 1 | 0-pad]  (128 lanes)
    z columns        : [gates i|f|g|o (128) | proc_h | proc_c | 0-pad]
    """
    f32 = jnp.float32
    t = pl.program_id(1)

    # Start of a new chain (new row-block): load the initial packed state.
    @pl.when(t == 0)
    def _():
        state_ref[...] = init_ref[...]

    state = state_ref[...]
    ext = ext_ref[...]

    # Fused pre-activations: gate partial (cols 0:128) + both processor MLPs
    # (cols 128:256).  Biases are folded in via the constant 1.0 lane of ext.
    z = (jnp.dot(state, w1s_ref[...], preferred_element_type=f32)
         + jnp.dot(ext, w1e_ref[...], preferred_element_type=f32))
    proc = jnp.maximum(z[:, GATES:], 0.0)            # [ph | pc | 0 | 0]

    # Recurrent gate contribution: only the proc_h rows of W2 are nonzero.
    gates = z[:, :GATES] + jnp.dot(proc, w2_ref[...],
                                   preferred_element_type=f32)

    # g columns were pre-scaled by 2 at pack time, so one sigmoid pass yields
    # sig(i|f|o) directly and tanh(g) = 2*sigmoid(2g) - 1 (VPU fma).
    sig = jax.nn.sigmoid(gates)
    tg = 2.0 * sig - 1.0                             # lanes 2H:3H = tanh(g)

    lane = jax.lax.broadcasted_iota(jnp.int32, gates.shape, 1)

    t_fc = sig * proc                                # lanes H:2H = sig(f)*pc
    t_ig = sig * pltpu.roll(tg, 2 * H, axis=1)       # lanes 0:H  = sig(i)*tanh(g)
    t_ig = jnp.where(lane < H, t_ig, 0.0)            # keep only lanes 0:H
    # Direction-agnostic +-H roll pair: exactly one of them deposits i*tanh(g)
    # on lanes H:2H; the other lands on lanes 3H:4H where t_fc is exactly zero.
    c_v = (t_fc + pltpu.roll(t_ig, H, axis=1)
           + pltpu.roll(t_ig, 3 * H, axis=1))        # lanes H:2H = c_new
    h_v = sig * jnp.tanh(pltpu.roll(c_v, 2 * H, axis=1))  # lanes 3H:4H = h_new

    # Next-step state slab == output slab: c_new at lanes H:2H, h_new at 3H:4H;
    # remaining lanes are finite don't-cares (killed by zero rows of W1s).
    new_state = jnp.where(lane < 2 * H, c_v, h_v)
    state_ref[...] = new_state
    out_ref[...] = new_state


def pack_params(p):
    """Pack the logical (PyTorch-equivalent) params into the fused weights."""
    f32 = jnp.float32
    # Fold a x2 scale into the g-gate columns (tanh(g) recovered from sigmoid).
    gscale = jnp.ones((GATES,), f32).at[2 * H:3 * H].set(2.0)

    # W1s: carried-state slab [junk|c|junk|h] -> z.  Zero rows kill the junk.
    W1s = jnp.zeros((GATES, ZCOLS), f32)
    W1s = W1s.at[H:2 * H,     PC0:PC0 + H].set(p["cpWa"])   # c -> processed_c
    W1s = W1s.at[3 * H:4 * H, PH0:PH0 + H].set(p["hpWa"])   # h -> processed_h

    # W1e: external slab [h_prev|c_prev|x|1|pad] -> z.
    W1e = jnp.zeros((GATES, ZCOLS), f32)
    W1e = W1e.at[0:H,     PH0:PH0 + H].set(p["hpWb"])       # h_prev -> processed_h
    W1e = W1e.at[H:2 * H, PC0:PC0 + H].set(p["cpWb"])       # c_prev -> processed_c
    W1e = W1e.at[2 * H:2 * H + INPUT_SIZE, 0:GATES].set(p["wih"] * gscale[None, :])
    W1e = W1e.at[EXT_BIAS_ROW, 0:GATES].set((p["bih"] + p["bhh"])[0] * gscale)
    W1e = W1e.at[EXT_BIAS_ROW, PH0:PH0 + H].set(p["hpb"][0])
    W1e = W1e.at[EXT_BIAS_ROW, PC0:PC0 + H].set(p["cpb"][0])

    # W2: recurrent gate contribution (only processed_h rows are nonzero).
    W2 = jnp.zeros((GATES, GATES), f32)
    W2 = W2.at[0:H, :].set(p["whh"] * gscale[None, :])
    return {"W1s": W1s, "W1e": W1e, "W2": W2}


@partial(jax.jit, static_argnames=("block_rows",))
def lattice_rnn_scan(x_seq, hprev_seq, cprev_seq, h0, c0, packed, *,
                     block_rows=None):
    """Run T sequential LatticeRNNCell steps over M independent (node, batch)
    rows inside ONE pallas_call.  The (h, c) produced at step t feed step t+1
    (the left-neighbor state of a 1D lattice scan); h_prev/c_prev/x are
    external per-step inputs.

    x_seq:     [T, M, INPUT_SIZE]
    hprev_seq: [T, M, HIDDEN]     cprev_seq: [T, M, HIDDEN]
    h0, c0:    [M, HIDDEN]        (initial left-neighbor state)
    Returns (h_seq, c_seq), each [T, M, HIDDEN].
    """
    f32 = jnp.float32
    T, M, I = x_seq.shape
    assert I == INPUT_SIZE
    if block_rows is None:
        block_rows = M
    assert M % block_rows == 0 and block_rows % 8 == 0
    R = M // block_rows

    # Pack the external inputs for the whole sequence ONCE (lane-aligned to 128).
    ones = jnp.ones((T, M, 1), f32)
    zpad = jnp.zeros((T, M, GATES - (2 * H + I + 1)), f32)
    ext = jnp.concatenate(
        [hprev_seq.astype(f32), cprev_seq.astype(f32), x_seq.astype(f32),
         ones, zpad], axis=-1)                                  # [T, M, 128]

    # Initial packed state slab: c0 at lanes H:2H, h0 at lanes 3H:4H.
    init = jnp.zeros((M, GATES), f32)
    init = init.at[:, H:2 * H].set(c0.astype(f32))
    init = init.at[:, 3 * H:4 * H].set(h0.astype(f32))

    out = pl.pallas_call(
        _lattice_scan_kernel,
        out_shape=jax.ShapeDtypeStruct((T, M, GATES), f32),
        grid_spec=pltpu.PrefetchScalarGridSpec(
            num_scalar_prefetch=0,
            grid=(R, T),
            in_specs=[
                # per-step external slab, streamed along the step axis
                pl.BlockSpec((None, block_rows, GATES), lambda r, t: (t, r, 0)),
                # initial state, constant along the step axis
                pl.BlockSpec((block_rows, GATES), lambda r, t: (r, 0)),
                # weights: constant block index -> VMEM-resident across steps
                pl.BlockSpec((GATES, ZCOLS), lambda r, t: (0, 0)),
                pl.BlockSpec((GATES, ZCOLS), lambda r, t: (0, 0)),
                pl.BlockSpec((GATES, GATES), lambda r, t: (0, 0)),
            ],
            out_specs=pl.BlockSpec((None, block_rows, GATES),
                                   lambda r, t: (t, r, 0)),
            scratch_shapes=[pltpu.VMEM((block_rows, GATES), f32)],
        ),
        compiler_params=pltpu.CompilerParams(
            dimension_semantics=("parallel", "arbitrary")),
    )(ext, init, packed["W1s"], packed["W1e"], packed["W2"])

    h_seq = out[:, :, 3 * H:4 * H]
    c_seq = out[:, :, H:2 * H]
    return h_seq, c_seq


def lattice_rnn_cell(x, hidden_states, packed):
    """Exact analogue of LatticeRNNCell.forward for a single cell.

    x:             [batch, 1, input_size]  (squeezed on dim 1, like PyTorch)
    hidden_states: (hidden, cell, hidden_prev, cell_prev), each [batch, hidden];
                   hidden/cell may be None -> zeros.
    """
    hidden, cell, hidden_prev, cell_prev = hidden_states
    B = hidden_prev.shape[0]
    if hidden is None:
        hidden = jnp.zeros((B, HIDDEN), jnp.float32)
        cell = jnp.zeros((B, HIDDEN), jnp.float32)
    x2 = jnp.squeeze(x, axis=1).astype(jnp.float32)     # x.squeeze(1).float()
    h_seq, c_seq = lattice_rnn_scan(x2[None], hidden_prev[None], cell_prev[None],
                                    hidden, cell, packed, block_rows=B)
    return h_seq[0], c_seq[0]


def init_params(key):
    """Deterministic logical params (PyTorch-style uniform bounds, transposed)."""
    ks = jax.random.split(key, 8)

    def uni(k, shape, fan_in):
        bound = 1.0 / jnp.sqrt(jnp.float32(fan_in))
        return jax.random.uniform(k, shape, jnp.float32, -bound, bound)

    # hidden_processor: Linear(2H -> H), split into its two H-wide halves
    hpW = uni(ks[0], (2 * HIDDEN, HIDDEN), 2 * HIDDEN)
    hpb = uni(ks[1], (1, HIDDEN), 2 * HIDDEN)
    # cell_processor: Linear(2H -> H)
    cpW = uni(ks[2], (2 * HIDDEN, HIDDEN), 2 * HIDDEN)
    cpb = uni(ks[3], (1, HIDDEN), 2 * HIDDEN)
    # LSTMCell: weight_ih [4H, I] stored [I, 4H]; weight_hh [4H, H] stored [H, 4H]
    wih = uni(ks[4], (INPUT_SIZE, 4 * HIDDEN), HIDDEN)
    bih = uni(ks[5], (1, 4 * HIDDEN), HIDDEN)
    whh = uni(ks[6], (HIDDEN, 4 * HIDDEN), HIDDEN)
    bhh = uni(ks[7], (1, 4 * HIDDEN), HIDDEN)

    return {
        "hpWa": hpW[:HIDDEN], "hpWb": hpW[HIDDEN:], "hpb": hpb,
        "cpWa": cpW[:HIDDEN], "cpWb": cpW[HIDDEN:], "cpb": cpb,
        "wih": wih, "bih": bih, "whh": whh, "bhh": bhh,
    }


# ----------------------------- pure-JAX references ---------------------------

def _reference_step(h, c, x, hp, cp, p):
    ph = jax.nn.relu(h @ p["hpWa"] + hp @ p["hpWb"] + p["hpb"])
    pc = jax.nn.relu(c @ p["cpWa"] + cp @ p["cpWb"] + p["cpb"])
    gates = x @ p["wih"] + p["bih"] + ph @ p["whh"] + p["bhh"]
    i, f, g, o = jnp.split(gates, 4, axis=-1)
    c_new = jax.nn.sigmoid(f) * pc + jax.nn.sigmoid(i) * jnp.tanh(g)
    h_new = jax.nn.sigmoid(o) * jnp.tanh(c_new)
    return h_new, c_new


def _reference_cell(x, hidden_states, params):
    hidden, cell, hidden_prev, cell_prev = hidden_states
    if hidden is None:
        hidden = jnp.zeros_like(hidden_prev)
        cell = jnp.zeros_like(cell_prev)
    x2 = jnp.squeeze(x, axis=1).astype(jnp.float32)
    return _reference_step(hidden, cell, x2, hidden_prev, cell_prev, params)


def _reference_scan(x_seq, hprev_seq, cprev_seq, h0, c0, params):
    def step(carry, inp):
        h, c = carry
        x, hp, cp = inp
        h_new, c_new = _reference_step(h, c, x, hp, cp, params)
        return (h_new, c_new), (h_new, c_new)

    _, (h_seq, c_seq) = jax.lax.scan(step, (h0, c0),
                                     (x_seq, hprev_seq, cprev_seq))
    return h_seq, c_seq


# ------------------------------------ main ------------------------------------

if __name__ == "__main__":
    key = jax.random.PRNGKey(0)
    keys = jax.random.split(key, 12)
    params = init_params(keys[0])
    packed = pack_params(params)

    # --- single-cell forward (matches LatticeRNNCell.forward exactly) ---
    B = BATCH
    x = jax.random.normal(keys[1], (B, 1, INPUT_SIZE), jnp.float32)
    hidden_left = jax.random.normal(keys[2], (B, HIDDEN), jnp.float32)
    cell_left = jax.random.normal(keys[3], (B, HIDDEN), jnp.float32)
    hidden_prev = jax.random.normal(keys[4], (B, HIDDEN), jnp.float32)
    cell_prev = jax.random.normal(keys[5], (B, HIDDEN), jnp.float32)
    hs = (hidden_left, cell_left, hidden_prev, cell_prev)

    h_out, c_out = lattice_rnn_cell(x, hs, packed)
    jax.block_until_ready((h_out, c_out))
    h_ref, c_ref = _reference_cell(x, hs, params)
    assert jnp.allclose(h_out, h_ref, atol=2e-3, rtol=2e-3)
    assert jnp.allclose(c_out, c_ref, atol=2e-3, rtol=2e-3)

    # --- batched multi-step lattice scan: loop + wavefront batching in-kernel ---
    T = 8                     # sequential lattice steps (state carried in VMEM)
    NODES = 16                # independent lattice rows batched into the MXU M dim
    M = NODES * BATCH         # 128 rows
    x_seq = jax.random.normal(keys[6], (T, M, INPUT_SIZE), jnp.float32)
    hprev_seq = jax.random.normal(keys[7], (T, M, HIDDEN), jnp.float32)
    cprev_seq = jax.random.normal(keys[8], (T, M, HIDDEN), jnp.float32)
    h0 = jax.random.normal(keys[9], (M, HIDDEN), jnp.float32)
    c0 = jax.random.normal(keys[10], (M, HIDDEN), jnp.float32)

    h_seq, c_seq = lattice_rnn_scan(x_seq, hprev_seq, cprev_seq, h0, c0, packed,
                                    block_rows=64)
    jax.block_until_ready((h_seq, c_seq))
    h_sref, c_sref = _reference_scan(x_seq, hprev_seq, cprev_seq, h0, c0, params)
    assert jnp.allclose(h_seq, h_sref, atol=2e-3, rtol=2e-3)
    assert jnp.allclose(c_seq, c_sref, atol=2e-3, rtol=2e-3)

    print("KERNEL_OK")
</pallas_src>

<mosaic_0001>
module attributes {stable_mosaic.version = 11 : i64} {
  func.func @_lattice_scan_kernel(%arg0: i32, %arg1: i32, %arg2: memref<1x8x128xf32, #tpu.memory_space<vmem>>, %arg3: memref<8x128xf32, #tpu.memory_space<vmem>>, %arg4: memref<128x256xf32, #tpu.memory_space<vmem>>, %arg5: memref<128x256xf32, #tpu.memory_space<vmem>>, %arg6: memref<128x128xf32, #tpu.memory_space<vmem>>, %arg7: memref<1x8x128xf32, #tpu.memory_space<vmem>>, %arg8: memref<8x128xf32, #tpu.memory_space<vmem>>) attributes {dimension_semantics = [#tpu.dimension_semantics<parallel>, #tpu.dimension_semantics<arbitrary>], iteration_bounds = array<i64: 1, 1>, scalar_prefetch = 0 : i64, scratch_operands = 1 : i64, tpu.core_type = #tpu.core_type<tc>, window_params = [{transform_indices = @transform_0, window_bounds = array<i64: 1, 8, 128>}, {transform_indices = @transform_1, window_bounds = array<i64: 8, 128>}, {pipeline_mode = #tpu.pipeline_mode<synchronous>, transform_indices = @transform_2, window_bounds = array<i64: 128, 256>}, {pipeline_mode = #tpu.pipeline_mode<synchronous>, transform_indices = @transform_3, window_bounds = array<i64: 128, 256>}, {pipeline_mode = #tpu.pipeline_mode<synchronous>, transform_indices = @transform_4, window_bounds = array<i64: 128, 128>}, {transform_indices = @transform_5, window_bounds = array<i64: 1, 8, 128>}]} {
    %c0_i32 = arith.constant 0 : i32
    %0 = arith.cmpi eq, %arg1, %c0_i32 : i32
    %1 = arith.extui %0 : i1 to i32
    %c0_i32_0 = arith.constant 0 : i32
    %2 = arith.cmpi ne, %1, %c0_i32_0 : i32
    scf.if %2 {
      %c0_26 = arith.constant 0 : index
      %c0_27 = arith.constant 0 : index
      %49 = vector.load %arg3[%c0_26, %c0_27] : memref<8x128xf32, #tpu.memory_space<vmem>>, vector<8x128xf32>
      %c0_28 = arith.constant 0 : index
      %c0_29 = arith.constant 0 : index
      %50 = vector.load %arg8[%c0_28, %c0_29] : memref<8x128xf32, #tpu.memory_space<vmem>>, vector<8x128xf32>
      tpu.vector_store %arg8[%c0_28, %c0_29], %49 {strides = array<i32>} : memref<8x128xf32, #tpu.memory_space<vmem>>, vector<8x128xf32>,
    } else {
    }
    %c0 = arith.constant 0 : index
    %c0_1 = arith.constant 0 : index
    %3 = vector.load %arg8[%c0, %c0_1] : memref<8x128xf32, #tpu.memory_space<vmem>>, vector<8x128xf32>
    %c0_2 = arith.constant 0 : index
    %c0_3 = arith.constant 0 : index
    %c0_4 = arith.constant 0 : index
    %4 = vector.load %arg2[%c0_2, %c0_3, %c0_4] : memref<1x8x128xf32, #tpu.memory_space<vmem>>, vector<1x8x128xf32>
    %5 = vector.shape_cast %4 : vector<1x8x128xf32> to vector<8x128xf32>
    %c0_5 = arith.constant 0 : index
    %c0_6 = arith.constant 0 : index
    %6 = vector.load %arg4[%c0_5, %c0_6] : memref<128x256xf32, #tpu.memory_space<vmem>>, vector<128x256xf32>
    %cst = arith.constant dense<0.000000e+00> : vector<8x256xf32>
    %7 = tpu.matmul %3, %6, %cst {dimension_numbers = #tpu.dot_dimension_numbers<[1], [0], [0], [1], [0, 0, 1, 1], [], []>} : vector<8x128xf32>, vector<128x256xf32>, vector<8x256xf32> -> vector<8x256xf32>
    %c0_7 = arith.constant 0 : index
    %c0_8 = arith.constant 0 : index
    %8 = vector.load %arg5[%c0_7, %c0_8] : memref<128x256xf32, #tpu.memory_space<vmem>>, vector<128x256xf32>
    %cst_9 = arith.constant dense<0.000000e+00> : vector<8x256xf32>
    %9 = tpu.matmul %5, %8, %cst_9 {dimension_numbers = #tpu.dot_dimension_numbers<[1], [0], [0], [1], [0, 0, 1, 1], [], []>} : vector<8x128xf32>, vector<128x256xf32>, vector<8x256xf32> -> vector<8x256xf32>
    %10 = arith.addf %7, %9 : vector<8x256xf32>
    %11 = vector.extract_strided_slice %10 {offsets = [0, 128], sizes = [8, 128], strides = [1, 1]} : vector<8x256xf32> to vector<8x128xf32>
    %cst_10 = arith.constant 0.000000e+00 : f32
    %12 = vector.broadcast %cst_10 : f32 to vector<8x128xf32>
    %13 = arith.maximumf %11, %12 : vector<8x128xf32>
    %14 = vector.extract_strided_slice %10 {offsets = [0, 0], sizes = [8, 128], strides = [1, 1]} : vector<8x256xf32> to vector<8x128xf32>
    %c0_11 = arith.constant 0 : index
    %c0_12 = arith.constant 0 : index
    %15 = vector.load %arg6[%c0_11, %c0_12] : memref<128x128xf32, #tpu.memory_space<vmem>>, vector<128x128xf32>
    %cst_13 = arith.constant dense<0.000000e+00> : vector<8x128xf32>
    %16 = tpu.matmul %13, %15, %cst_13 {dimension_numbers = #tpu.dot_dimension_numbers<[1], [0], [0], [1], [0, 0, 1, 1], [], []>} : vector<8x128xf32>, vector<128x128xf32>, vector<8x128xf32> -> vector<8x128xf32>
    %17 = arith.addf %14, %16 : vector<8x128xf32>
    %18 = arith.negf %17 : vector<8x128xf32>
    %19 = math.exp %18 : vector<8x128xf32>
    %cst_14 = arith.constant 1.000000e+00 : f32
    %20 = vector.broadcast %cst_14 : f32 to vector<8x128xf32>
    %21 = arith.addf %20, %19 : vector<8x128xf32>
    %22 = arith.divf %20, %21 : vector<8x128xf32>
    %cst_15 = arith.constant 2.000000e+00 : f32
    %23 = vector.broadcast %cst_15 : f32 to vector<8x128xf32>
    %24 = arith.mulf %23, %22 : vector<8x128xf32>
    %cst_16 = arith.constant 1.000000e+00 : f32
    %25 = vector.broadcast %cst_16 : f32 to vector<8x128xf32>
    %26 = arith.subf %24, %25 : vector<8x128xf32>
    %27 = tpu.iota {dimensions = array<i32: 1>} : vector<8x128xi32>
    %28 = arith.mulf %22, %13 : vector<8x128xf32>
    %c64_i32 = arith.constant 64 : i32
    %29 = tpu.dynamic_rotate %26 by %c64_i32 dim 1 : vector<8x128xf32>, i32 -> vector<8x128xf32>
    %30 = arith.mulf %22, %29 : vector<8x128xf32>
    %c32_i32 = arith.constant 32 : i32
    %31 = vector.broadcast %c32_i32 : i32 to vector<8x128xi32>
    %32 = arith.cmpi slt, %27, %31 : vector<8x128xi32>
    %cst_17 = arith.constant 0.000000e+00 : f32
    %33 = vector.broadcast %cst_17 : f32 to vector<8x128xf32>
    %34 = arith.select %32, %30, %33 : vector<8x128xi1>, vector<8x128xf32>
    %c32_i32_18 = arith.constant 32 : i32
    %35 = tpu.dynamic_rotate %34 by %c32_i32_18 dim 1 : vector<8x128xf32>, i32 -> vector<8x128xf32>
    %36 = arith.addf %28, %35 : vector<8x128xf32>
    %c96_i32 = arith.constant 96 : i32
    %37 = tpu.dynamic_rotate %34 by %c96_i32 dim 1 : vector<8x128xf32>, i32 -> vector<8x128xf32>
    %38 = arith.addf %36, %37 : vector<8x128xf32>
    %c64_i32_19 = arith.constant 64 : i32
    %39 = tpu.dynamic_rotate %38 by %c64_i32_19 dim 1 : vector<8x128xf32>, i32 -> vector<8x128xf32>
    %40 = math.tanh %39 : vector<8x128xf32>
    %41 = arith.mulf %22, %40 : vector<8x128xf32>
    %c64_i32_20 = arith.constant 64 : i32
    %42 = vector.broadcast %c64_i32_20 : i32 to vector<8x128xi32>
    %43 = arith.cmpi slt, %27, %42 : vector<8x128xi32>
    %44 = arith.select %43, %38, %41 : vector<8x128xi1>, vector<8x128xf32>
    %c0_21 = arith.constant 0 : index
    %c0_22 = arith.constant 0 : index
    %45 = vector.load %arg8[%c0_21, %c0_22] : memref<8x128xf32, #tpu.memory_space<vmem>>, vector<8x128xf32>
    tpu.vector_store %arg8[%c0_21, %c0_22], %44 {strides = array<i32>} : memref<8x128xf32, #tpu.memory_space<vmem>>, vector<8x128xf32>,
    %c0_23 = arith.constant 0 : index
    %c0_24 = arith.constant 0 : index
    %c0_25 = arith.constant 0 : index
    %46 = vector.load %arg7[%c0_23, %c0_24, %c0_25] : memref<1x8x128xf32, #tpu.memory_space<vmem>>, vector<1x8x128xf32>
    %47 = vector.shape_cast %46 : vector<1x8x128xf32> to vector<8x128xf32>
    %48 = vector.shape_cast %44 : vector<8x128xf32> to vector<1x8x128xf32>
    tpu.vector_store %arg7[%c0_23, %c0_24, %c0_25], %48 {strides = array<i32>} : memref<1x8x128xf32, #tpu.memory_space<vmem>>, vector<1x8x128xf32>,
    return
  }
  func.func @transform_0(%arg0: i32, %arg1: i32) -> (i32, i32, i32) {
    %c0_i32 = arith.constant 0 : i32
    %c0_i32_0 = arith.constant 0 : i32
    return %arg1, %arg0, %c0_i32 : i32, i32, i32
  }
  func.func @transform_1(%arg0: i32, %arg1: i32) -> (i32, i32) {
    %c0_i32 = arith.constant 0 : i32
    %c0_i32_0 = arith.constant 0 : i32
    return %arg0, %c0_i32 : i32, i32
  }
  func.func @transform_2(%arg0: i32, %arg1: i32) -> (i32, i32) {
    %c0_i32 = arith.constant 0 : i32
    %c0_i32_0 = arith.constant 0 : i32
    %c0_i32_1 = arith.constant 0 : i32
    return %c0_i32, %c0_i32_0 : i32, i32
  }
  func.func @transform_3(%arg0: i32, %arg1: i32) -> (i32, i32) {
    %c0_i32 = arith.constant 0 : i32
    %c0_i32_0 = arith.constant 0 : i32
    %c0_i32_1 = arith.constant 0 : i32
    return %c0_i32, %c0_i32_0 : i32, i32
  }
  func.func @transform_4(%arg0: i32, %arg1: i32) -> (i32, i32) {
    %c0_i32 = arith.constant 0 : i32
    %c0_i32_0 = arith.constant 0 : i32
    %c0_i32_1 = arith.constant 0 : i32
    return %c0_i32, %c0_i32_0 : i32, i32
  }
  func.func @transform_5(%arg0: i32, %arg1: i32) -> (i32, i32, i32) {
    %c0_i32 = arith.constant 0 : i32
    %c0_i32_0 = arith.constant 0 : i32
    return %arg1, %arg0, %c0_i32 : i32, i32, i32
  }
}

</mosaic_0001>

<llo_original>
// kernel: lattice_rnn_scan.1
$region0: #{lattice_rnn_scan.1}
  #allocation0 [shape = 'u32[]', space=smem, size = 0x4, offset = 0x4, fixed_abs, tag = 'smem constant byte address 0x4 - core index']
  #allocation1 [shape = 'u32[72,128]{1,0:T(1,128)}', space=vmem, size = 0x9000, scoped, tag = 'internal scratch']
  #allocation2 [shape = 'f32[8,128]{1,0:T(8,128)}', space=vmem, size = 0x1000, scoped, tag = 'scratch operand']
  %s0 = inlined_call_operand.vmem [shape: f32[1,8,128], index: 0, kind: input, shape index: {}]
  %s1 = inlined_call_operand.vmem [shape: f32[8,128], index: 1, kind: input, shape index: {}]
  %s2 = inlined_call_operand.hbm [shape: f32[128,256], index: 2, kind: input, shape index: {}]
  %s3 = inlined_call_operand.hbm [shape: f32[128,256], index: 3, kind: input, shape index: {}]
  %s4 = inlined_call_operand.hbm [shape: f32[128,128], index: 4, kind: input, shape index: {}]
  %s5 = inlined_call_operand.vmem [shape: f32[1,8,128], index: 5, kind: output, shape index: {}]
  %s6 = sld [smem:[#allocation0]]
  $region46: #{lattice_rnn_scan.1} parent=0
    _
  %s8 = ssub.s32 1, %s6
  %s9 = scalar_select 0, %s8, %s6
  $region1: #{lattice_rnn_scan.1} parent=0
    #allocation3 [shape = 'u8[131072]{0}', space=vmem, size = 0x20000, scoped, tag = 'input window, operand 2, single buffered']
    #allocation4 [shape = 's32[1]{0}', space=sflag, size = 0x4, scoped, tag = 'scoped memory for lattice_rnn_scan.1']
    #allocation5 [shape = 'u8[131072]{0}', space=vmem, size = 0x20000, scoped, tag = 'input window, operand 3, single buffered']
    #allocation6 [shape = 's32[1]{0}', space=sflag, size = 0x4, scoped, tag = 'scoped memory for lattice_rnn_scan.1']
    #allocation7 [shape = 'u8[65536]{0}', space=vmem, size = 0x10000, scoped, tag = 'input window, operand 4, single buffered']
    %10 = vsyncpa [#allocation4], 0
    %11 = vsyncpa [#allocation6], 0
    // Predicated region
    $region2: #{lattice_rnn_scan.1} parent=1 // pred_check
      _
    $region3: #{lattice_rnn_scan.1} parent=1 // pred_check_branch
      %13 = sbr.rel (0) target = $region5
    $region4: #{lattice_rnn_scan.1} parent=1 // pred_region
      _
    $region5: #{lattice_rnn_scan.1} parent=1 // pred_fallthru
      _
    // Predicated region
    $region6: #{lattice_rnn_scan.1} parent=1 // pred_check
      _
    $region7: #{lattice_rnn_scan.1} parent=1 // pred_check_branch
      %15 = sbr.rel (0) target = $region9
    $region8: #{lattice_rnn_scan.1} parent=1 // pred_region
      _
    $region9: #{lattice_rnn_scan.1} parent=1 // pred_fallthru
      _
    // Predicated region
    $region10: #{lattice_rnn_scan.1} parent=1 // pred_check
      _
    $region11: #{lattice_rnn_scan.1} parent=1 // pred_check_branch
      %17 = sbr.rel (0) target = $region13
    $region12: #{lattice_rnn_scan.1} parent=1 // pred_region
      %19 = vsyncadd [#allocation4], 0
      %s20 = sshll.u32 %s2, 4
      %s21 = int_to_ptr.hbm [resolvable:$true] %s20
      %s22 = sshll.u32 [#allocation3], 4
      %s23 = int_to_ptr.vmem [resolvable:$true] %s22
      %28 = dma.hbm_to_vmem [thread:$0]  %s21, 4096, %s23, [#allocation4], 256, 256, 16
    $region13: #{lattice_rnn_scan.1} parent=1 // pred_fallthru
      _
    // Predicated region
    $region14: #{lattice_rnn_scan.1} parent=1 // pred_check
      _
    $region15: #{lattice_rnn_scan.1} parent=1 // pred_check_branch
      %30 = sbr.rel (0) target = $region17
    $region16: #{lattice_rnn_scan.1} parent=1 // pred_region
      %32 = vsyncadd [#allocation6], 0
      %s33 = sshll.u32 %s3, 4
      %s34 = int_to_ptr.hbm [resolvable:$true] %s33
      %s35 = sshll.u32 [#allocation5], 4
      %s36 = int_to_ptr.vmem [resolvable:$true] %s35
      %41 = dma.hbm_to_vmem [thread:$0]  %s34, 4096, %s36, [#allocation6], 256, 256, 16
    $region17: #{lattice_rnn_scan.1} parent=1 // pred_fallthru
      _
    // Predicated region
    $region18: #{lattice_rnn_scan.1} parent=1 // pred_check
      _
    $region19: #{lattice_rnn_scan.1} parent=1 // pred_check_branch
      %43 = sbr.rel (0) target = $region21
    $region20: #{lattice_rnn_scan.1} parent=1 // pred_region
      %45 = vsyncadd [#allocation6], 0
      %s46 = sshll.u32 %s4, 4
      %s47 = int_to_ptr.hbm [resolvable:$true] %s46
      %s48 = sshll.u32 [#allocation7], 4
      %s49 = int_to_ptr.vmem [resolvable:$true] %s48
      %54 = dma.hbm_to_vmem [thread:$0]  %s47, 2048, %s49, [#allocation6], 128, 128, 8
    $region21: #{lattice_rnn_scan.1} parent=1 // pred_fallthru
      _
    // Predicated region
    $region22: #{lattice_rnn_scan.1} parent=1 // pred_check
      _
    $region23: #{lattice_rnn_scan.1} parent=1 // pred_check_branch
      %56 = sbr.rel (0) target = $region25
    $region24: #{lattice_rnn_scan.1} parent=1 // pred_region
      %58 = dma.done [#allocation4], 4096
    $region25: #{lattice_rnn_scan.1} parent=1 // pred_fallthru
      _
    // Predicated region
    $region26: #{lattice_rnn_scan.1} parent=1 // pred_check
      _
    $region27: #{lattice_rnn_scan.1} parent=1 // pred_check_branch
      %60 = sbr.rel (0) target = $region29
    $region28: #{lattice_rnn_scan.1} parent=1 // pred_region
      %62 = dma.done [#allocation6], 4096
    $region29: #{lattice_rnn_scan.1} parent=1 // pred_fallthru
      _
    // Predicated region
    $region30: #{lattice_rnn_scan.1} parent=1 // pred_check
      _
    $region31: #{lattice_rnn_scan.1} parent=1 // pred_check_branch
      %64 = sbr.rel (0) target = $region33
    $region32: #{lattice_rnn_scan.1} parent=1 // pred_region
      %66 = dma.done [#allocation6], 2048
    $region33: #{lattice_rnn_scan.1} parent=1 // pred_fallthru
      _
    %p67 = scmp.eq.s32.totalorder 0, 0
    // Predicated region
    $region34: #{lattice_rnn_scan.1} parent=1 // pred_check
      %p68 = pneg %p67
    $region35: #{lattice_rnn_scan.1} parent=1 // pred_check_branch
      %70 = sbr.rel (%p68) target = $region37
    $region36: #{lattice_rnn_scan.1} parent=1 // pred_region
      %v71 = vld [vmem:[%s1] sm:$0xff]
      %72 = vst [vmem:[#allocation2] sm:$0xff] %v71
    $region37: #{lattice_rnn_scan.1} parent=1 // pred_fallthru
      _
    %v73 = vld [vmem:[#allocation2] sm:$0xff]
    %v74 = vld [vmem:[%s0] sm:$0xff]
    %v75 = vld [vmem:[#allocation3] sm:$0xff]
    %v76 = vld [vmem:[#allocation3 + $0x8] sm:$0xff]
    %v77 = vld [vmem:[#allocation3 + $0x10] sm:$0xff]
    %v78 = vld [vmem:[#allocation3 + $0x18] sm:$0xff]
    %v79 = vld [vmem:[#allocation3 + $0x20] sm:$0xff]
    %v80 = vld [vmem:[#allocation3 + $0x28] sm:$0xff]
    %v81 = vld [vmem:[#allocation3 + $0x30] sm:$0xff]
    %v82 = vld [vmem:[#allocation3 + $0x38] sm:$0xff]
    %v83 = vld [vmem:[#allocation3 + $0x40] sm:$0xff]
    %v84 = vld [vmem:[#allocation3 + $0x48] sm:$0xff]
    %v85 = vld [vmem:[#allocation3 + $0x50] sm:$0xff]
    %v86 = vld [vmem:[#allocation3 + $0x58] sm:$0xff]
    %v87 = vld [vmem:[#allocation3 + $0x60] sm:$0xff]
    %v88 = vld [vmem:[#allocation3 + $0x68] sm:$0xff]
    %v89 = vld [vmem:[#allocation3 + $0x70] sm:$0xff]
    %v90 = vld [vmem:[#allocation3 + $0x78] sm:$0xff]
    %v91 = vld [vmem:[#allocation3 + $0x80] sm:$0xff]
    %v92 = vld [vmem:[#allocation3 + $0x88] sm:$0xff]
    %v93 = vld [vmem:[#allocation3 + $0x90] sm:$0xff]
    %v94 = vld [vmem:[#allocation3 + $0x98] sm:$0xff]
    %v95 = vld [vmem:[#allocation3 + $0xa0] sm:$0xff]
    %v96 = vld [vmem:[#allocation3 + $0xa8] sm:$0xff]
    %v97 = vld [vmem:[#allocation3 + $0xb0] sm:$0xff]
    %v98 = vld [vmem:[#allocation3 + $0xb8] sm:$0xff]
    %v99 = vld [vmem:[#allocation3 + $0xc0] sm:$0xff]
    %v100 = vld [vmem:[#allocation3 + $0xc8] sm:$0xff]
    %v101 = vld [vmem:[#allocation3 + $0xd0] sm:$0xff]
    %v102 = vld [vmem:[#allocation3 + $0xd8] sm:$0xff]
    %v103 = vld [vmem:[#allocation3 + $0xe0] sm:$0xff]
    %v104 = vld [vmem:[#allocation3 + $0xe8] sm:$0xff]
    %v105 = vld [vmem:[#allocation3 + $0xf0] sm:$0xff]
    %v106 = vld [vmem:[#allocation3 + $0xf8] sm:$0xff]
    %v107 = vld [vmem:[#allocation5] sm:$0xff]
    %v108 = vld [vmem:[#allocation5 + $0x8] sm:$0xff]
    %v109 = vld [vmem:[#allocation5 + $0x10] sm:$0xff]
    %v110 = vld [vmem:[#allocation5 + $0x18] sm:$0xff]
    %v111 = vld [vmem:[#allocation5 + $0x20] sm:$0xff]
    %v112 = vld [vmem:[#allocation5 + $0x28] sm:$0xff]
    %v113 = vld [vmem:[#allocation5 + $0x30] sm:$0xff]
    %v114 = vld [vmem:[#allocation5 + $0x38] sm:$0xff]
    %v115 = vld [vmem:[#allocation5 + $0x40] sm:$0xff]
    %v116 = vld [vmem:[#allocation5 + $0x48] sm:$0xff]
    %v117 = vld [vmem:[#allocation5 + $0x50] sm:$0xff]
    %v118 = vld [vmem:[#allocation5 + $0x58] sm:$0xff]
    %v119 = vld [vmem:[#allocation5 + $0x60] sm:$0xff]
    %v120 = vld [vmem:[#allocation5 + $0x68] sm:$0xff]
    %v121 = vld [vmem:[#allocation5 + $0x70] sm:$0xff]
    %v122 = vld [vmem:[#allocation5 + $0x78] sm:$0xff]
    %v123 = vld [vmem:[#allocation5 + $0x80] sm:$0xff]
    %v124 = vld [vmem:[#allocation5 + $0x88] sm:$0xff]
    %v125 = vld [vmem:[#allocation5 + $0x90] sm:$0xff]
    %v126 = vld [vmem:[#allocation5 + $0x98] sm:$0xff]
    %v127 = vld [vmem:[#allocation5 + $0xa0] sm:$0xff]
    %v128 = vld [vmem:[#allocation5 + $0xa8] sm:$0xff]
    %v129 = vld [vmem:[#allocation5 + $0xb0] sm:$0xff]
    %v130 = vld [vmem:[#allocation5 + $0xb8] sm:$0xff]
    %v131 = vld [vmem:[#allocation5 + $0xc0] sm:$0xff]
    %v132 = vld [vmem:[#allocation5 + $0xc8] sm:$0xff]
    %v133 = vld [vmem:[#allocation5 + $0xd0] sm:$0xff]
    %v134 = vld [vmem:[#allocation5 + $0xd8] sm:$0xff]
    %v135 = vld [vmem:[#allocation5 + $0xe0] sm:$0xff]
    %v136 = vld [vmem:[#allocation5 + $0xe8] sm:$0xff]
    %v137 = vld [vmem:[#allocation5 + $0xf0] sm:$0xff]
    %v138 = vld [vmem:[#allocation5 + $0xf8] sm:$0xff]
    %139 = vmatpush.msra.mxu0 %v137
    %140 = vmatpush.msra.mxu0 %v135
    %141 = vmatpush.msra.mxu0 %v133
    %142 = vmatpush.msra.mxu0 %v131
    %143 = vmatpush.msra.mxu0 %v129
    %144 = vmatpush.msra.mxu0 %v127
    %145 = vmatpush.msra.mxu0 %v125
    %146 = vmatpush.msra.mxu0 %v123
    %147 = vmatpush.msra.mxu0 %v121
    %148 = vmatpush.msra.mxu0 %v119
    %149 = vmatpush.msra.mxu0 %v117
    %150 = vmatpush.msra.mxu0 %v115
    %151 = vmatpush.msra.mxu0 %v113
    %152 = vmatpush.msra.mxu0 %v111
    %153 = vmatpush.msra.mxu0 %v109
    %154 = vmatpush.msra.mxu0 %v107
    %155 = vmatmul.f32.gmra.mxu0 %v74
    %v156 = vpop.f32.mrf.mxu0
    %v157 = vadd.f32 0.0, %v156
    %158 = vdwg.mxu0
    %159 = vmatpush.msra.mxu0 %v138
    %160 = vmatpush.msra.mxu0 %v136
    %161 = vmatpush.msra.mxu0 %v134
    %162 = vmatpush.msra.mxu0 %v132
    %163 = vmatpush.msra.mxu0 %v130
    %164 = vmatpush.msra.mxu0 %v128
    %165 = vmatpush.msra.mxu0 %v126
    %166 = vmatpush.msra.mxu0 %v124
    %167 = vmatpush.msra.mxu0 %v122
    %168 = vmatpush.msra.mxu0 %v120
    %169 = vmatpush.msra.mxu0 %v118
    %170 = vmatpush.msra.mxu0 %v116
    %171 = vmatpush.msra.mxu0 %v114
    %172 = vmatpush.msra.mxu0 %v112
    %173 = vmatpush.msra.mxu0 %v110
    %174 = vmatpush.msra.mxu0 %v108
    %175 = vmatmul.f32.gmra.mxu0 %v74
    %v176 = vpop.f32.mrf.mxu0
    %v177 = vadd.f32 0.0, %v176
    %178 = vdwg.mxu0
    %179 = vmatpush.msra.mxu0 %v105
    %180 = vmatpush.msra.mxu0 %v103
    %181 = vmatpush.msra.mxu0 %v101
    %182 = vmatpush.msra.mxu0 %v99
    %183 = vmatpush.msra.mxu0 %v97
    %184 = vmatpush.msra.mxu0 %v95
    %185 = vmatpush.msra.mxu0 %v93
    %186 = vmatpush.msra.mxu0 %v91
    %187 = vmatpush.msra.mxu0 %v89
    %188 = vmatpush.msra.mxu0 %v87
    %189 = vmatpush.msra.mxu0 %v85
    %190 = vmatpush.msra.mxu0 %v83
    %191 = vmatpush.msra.mxu0 %v81
    %192 = vmatpush.msra.mxu0 %v79
    %193 = vmatpush.msra.mxu0 %v77
    %194 = vmatpush.msra.mxu0 %v75
    %195 = vmatmul.f32.gmra.mxu0 %v73
    %v196 = vpop.f32.mrf.mxu0
    %v197 = vadd.f32 %v157, %v196
    %198 = vdwg.mxu0
    %199 = vmatpush.msra.mxu0 %v106
    %200 = vmatpush.msra.mxu0 %v104
    %201 = vmatpush.msra.mxu0 %v102
    %202 = vmatpush.msra.mxu0 %v100
    %203 = vmatpush.msra.mxu0 %v98
    %204 = vmatpush.msra.mxu0 %v96
    %205 = vmatpush.msra.mxu0 %v94
    %206 = vmatpush.msra.mxu0 %v92
    %207 = vmatpush.msra.mxu0 %v90
    %208 = vmatpush.msra.mxu0 %v88
    %209 = vmatpush.msra.mxu0 %v86
    %210 = vmatpush.msra.mxu0 %v84
    %211 = vmatpush.msra.mxu0 %v82
    %212 = vmatpush.msra.mxu0 %v80
    %213 = vmatpush.msra.mxu0 %v78
    %214 = vmatpush.msra.mxu0 %v76
    %215 = vmatmul.f32.gmra.mxu0 %v73
    %v216 = vpop.f32.mrf.mxu0
    %v217 = vadd.f32 %v177, %v216
    %218 = vdwg.mxu0
    %v219 = vmax.f32 %v217, 0.0
    %v220 = vld [vmem:[#allocation7] sm:$0xff]
    %v221 = vld [vmem:[#allocation7 + $0x8] sm:$0xff]
    %v222 = vld [vmem:[#allocation7 + $0x10] sm:$0xff]
    %v223 = vld [vmem:[#allocation7 + $0x18] sm:$0xff]
    %v224 = vld [vmem:[#allocation7 + $0x20] sm:$0xff]
    %v225 = vld [vmem:[#allocation7 + $0x28] sm:$0xff]
    %v226 = vld [vmem:[#allocation7 + $0x30] sm:$0xff]
    %v227 = vld [vmem:[#allocation7 + $0x38] sm:$0xff]
    %v228 = vld [vmem:[#allocation7 + $0x40] sm:$0xff]
    %v229 = vld [vmem:[#allocation7 + $0x48] sm:$0xff]
    %v230 = vld [vmem:[#allocation7 + $0x50] sm:$0xff]
    %v231 = vld [vmem:[#allocation7 + $0x58] sm:$0xff]
    %v232 = vld [vmem:[#allocation7 + $0x60] sm:$0xff]
    %v233 = vld [vmem:[#allocation7 + $0x68] sm:$0xff]
    %v234 = vld [vmem:[#allocation7 + $0x70] sm:$0xff]
    %v235 = vld [vmem:[#allocation7 + $0x78] sm:$0xff]
    %236 = vmatpush.msra.mxu0 %v235
    %237 = vmatpush.msra.mxu0 %v234
    %238 = vmatpush.msra.mxu0 %v233
    %239 = vmatpush.msra.mxu0 %v232
    %240 = vmatpush.msra.mxu0 %v231
    %241 = vmatpush.msra.mxu0 %v230
    %242 = vmatpush.msra.mxu0 %v229
    %243 = vmatpush.msra.mxu0 %v228
    %244 = vmatpush.msra.mxu0 %v227
    %245 = vmatpush.msra.mxu0 %v226
    %246 = vmatpush.msra.mxu0 %v225
    %247 = vmatpush.msra.mxu0 %v224
    %248 = vmatpush.msra.mxu0 %v223
    %249 = vmatpush.msra.mxu0 %v222
    %250 = vmatpush.msra.mxu0 %v221
    %251 = vmatpush.msra.mxu0 %v220
    %252 = vmatmul.f32.gmra.mxu0 %v219
    %v253 = vpop.f32.mrf.mxu0
    %v254 = vadd.f32 0.0, %v253
    %255 = vdwg.mxu0
    %v256 = vadd.f32 %v197, %v254
    %v257 = vxor.u32 %v256, 2147483648
    %v258 = vmul.f32 %v257, 1.442695
    %v259 = vpow.pop %v258
    %v260 = vadd.f32 %v259, 1.0
    %v261 = vrcp.pop %v260
    %v262 = vmul.f32 %v260, %v261
    %v263 = vsub.f32 1.0, %v262
    %v264 = vmul.f32 %v261, %v263
    %v265 = vadd.f32 %v261, %v264
    %vm266 = vweird.f32 %v260
    %vm267 = vweird.f32 %v261
    %vm268 = vmor %vm266, %vm267
    %v269 = vsel %vm268, %v261, %v265
    %v270 = vand.u32 2147483647, %v260
    %vm271 = vcmp.eq.f32.partialorder %v270, 8.507059e+37
    %v272 = vand.u32 %v260, 2147483648
    %v273 = vor.u32 1.1754944e-38, %v272
    %v274 = vsel %vm271, %v273, %v269
    %v275 = vmul.f32 1.0, %v274
    %v276 = vmul.f32 %v275, 2.0
    %v277 = vsub.f32 %v276, 1.0
    %v278 = vlaneseq
    %v279 = vand.u32 %v278, 127
    %v280 = vmul.f32 %v275, %v219
    %281 = vrot.lane.b32.xlu0 %v277, 64
    %v282 = vpop.permute.xlu0 %281
    %v283 = vmul.f32 %v275, %v282
    %vm284 = vcmp.lt.s32.totalorder %v279, 32
    %v285 = vsel %vm284, %v283, 0.0
    %286 = vrot.lane.b32.xlu0 %v285, 32
    %v287 = vpop.permute.xlu0 %286
    %v288 = vadd.f32 %v280, %v287
    %289 = vrot.lane.b32.xlu0 %v285, 96
    %v290 = vpop.permute.xlu0 %289
    %v291 = vadd.f32 %v288, %v290
    %292 = vrot.lane.b32.xlu0 %v291, 64
    %v293 = vpop.permute.xlu0 %292
    %v294 = vtanh.pop %v293
    %v295 = vmul.f32 %v275, %v294
    %vm296 = vcmp.lt.s32.totalorder %v279, 64
    %v297 = vsel %vm296, %v291, %v295
    %298 = vst [vmem:[#allocation2] sm:$0xff] %v297
    %299 = vst [vmem:[%s5] sm:$0xff] %v297
    // Predicated region
    $region38: #{lattice_rnn_scan.1} parent=1 // pred_check
      _
    $region39: #{lattice_rnn_scan.1} parent=1 // pred_check_branch
      %301 = sbr.rel (0) target = $region41
    $region40: #{lattice_rnn_scan.1} parent=1 // pred_region
      _
    $region41: #{lattice_rnn_scan.1} parent=1 // pred_fallthru
      _
    // Predicated region
    $region42: #{lattice_rnn_scan.1} parent=1 // pred_check
      _
    $region43: #{lattice_rnn_scan.1} parent=1 // pred_check_branch
      %303 = sbr.rel (0) target = $region45
    $region44: #{lattice_rnn_scan.1} parent=1 // pred_region
      _
    $region45: #{lattice_rnn_scan.1} parent=1 // pred_fallthru
      _
    %304 = vsyncpa [#allocation4], 1
    %305 = vsyncpa [#allocation6], 1

</llo_original>
